<compile_context>
chip_gen: v7x
topology: tpu7x:2x2x1
jax: 0.10.0
libtpu: 0.0.40
codegen_flags: <defaults>
</compile_context>

<pallas_src>
import jax
import jax.numpy as jnp
import numpy as np
from jax import lax
from jax.experimental import pallas as pl
from jax.experimental.pallas import tpu as pltpu

PAD = 1
EPS = 1e-8  # matches torch.nn.CosineEmbeddingLoss / F.cosine_similarity eps


def _masked_cos_loss_kernel(lens_ref, emb_ref, pred_ref, out_ref):
    j = pl.program_id(1)          # sequence-tile index (reduction axis, last in grid)
    ns = pl.num_programs(1)

    @pl.when(j == 0)
    def _init():
        out_ref[...] = jnp.zeros_like(out_ref)

    # Cast once per block; accumulate everything in f32 (fixes bf16 precision and
    # avoids three separately-upcast full-tile products).
    e = emb_ref[...].astype(jnp.float32)        # (TN, TS, D)
    p = pred_ref[...].astype(jnp.float32)       # (TN, TS, D)
    tn, ts, _ = e.shape

    # Row-wise reductions over D (lane axis) -> (TN, TS) f32.
    ep = jnp.sum(e * p, axis=-1)
    ee = jnp.sum(e * e, axis=-1)
    pp = jnp.sum(p * p, axis=-1)

    # cos = <e,p> / (max(||e||,eps) * max(||p||,eps))
    # rsqrt(max(x, eps^2)) == 1 / max(sqrt(x), eps); rsqrt runs on the EUP slot.
    inv_ne = lax.rsqrt(jnp.maximum(ee, EPS * EPS))
    inv_np = lax.rsqrt(jnp.maximum(pp, EPS * EPS))
    loss = 1.0 - ep * inv_ne * inv_np            # (TN, TS)

    # Validity mask: global positions strictly before the first pad token.
    # jnp.where (not multiply) so garbage in partial edge blocks cannot poison
    # the accumulator (even if it is NaN/inf).
    lens = lens_ref[...]                         # (TN, 1) int32 valid lengths
    pos = j * ts + lax.broadcasted_iota(jnp.int32, (tn, ts), 1)
    masked = jnp.where(pos < lens, loss, 0.0)

    # Accumulate directly into the resident output block (revisited across j).
    out_ref[...] += jnp.sum(masked, axis=1, keepdims=True)

    @pl.when(j == ns - 1)
    def _finalize():
        # Per-sample mean; count of valid tokens == lens.  0/0 -> NaN for
        # zero-length samples (matches the torch/NumPy reference); filler rows
        # from tiny-batch padding are sliced away outside the kernel.
        out_ref[...] = out_ref[...] / lens.astype(jnp.float32)


def masked_cosine_embedding_loss(src_embeds, preds, src, pad=PAD,
                                 tile_n=None, tile_s=None):
    """src_embeds, preds: (N, S, D) float; src: (N, S) int ids. Returns scalar f32."""
    N, S, D = src_embeds.shape
    itemsize = jnp.dtype(src_embeds.dtype).itemsize

    # Per-sample first-pad index (S if no pad) -- cheap XLA reduce off the hot path.
    pos = jnp.arange(S, dtype=jnp.int32)
    lens = jnp.min(jnp.where(src == pad, pos, jnp.int32(S)), axis=1).astype(jnp.int32)

    # Toy batches: pad to the minimum 8-row sublane tile (negligible copy).
    # Larger batches use partial edge blocks instead of a padding copy.
    n_rows = N
    if N < 8:
        extra = 8 - N
        src_embeds = jnp.pad(src_embeds, ((0, extra), (0, 0), (0, 0)))
        preds = jnp.pad(preds, ((0, extra), (0, 0), (0, 0)))
        lens = jnp.pad(lens, (0, extra))          # filler rows: len=0 -> NaN, sliced away
        n_rows = 8
    lens2 = lens.reshape(n_rows, 1)

    # ---- generation-aware VMEM budget & dtype-aware tile sizing ----------------
    try:
        vmem_cap = int(pltpu.get_tpu_info().vmem_capacity_bytes)
    except Exception:
        vmem_cap = 64 * 1024 * 1024               # conservative fallback: v7x per-TC VMEM
    vmem_limit = int(min(96 * 1024 * 1024, (vmem_cap * 3) // 4))   # 96 MiB / 48 MiB (v7x)
    budget = (vmem_limit * 7) // 8                # headroom for misc scratch / code

    d_lanes = ((D + 127) // 128) * 128            # lane padding in VMEM when D < 128 / ragged
    k_f32 = 3 if itemsize >= 4 else 5             # f32 temporaries per element (upcasts+products)
    bytes_per_elem = 2 * 2 * itemsize + 4 * k_f32 # 2 inputs x 2 pipeline buffers + f32 temps
    max_elems = max(budget // bytes_per_elem, 8 * 8 * d_lanes)

    # Sequence tile: full S when even the minimal 8-row batch tile fits the budget.
    if tile_s is not None:
        ts = S if tile_s >= S else max(8, (tile_s // 8) * 8)
    elif 8 * S * d_lanes <= max_elems:
        ts = S
    else:
        ts = min(S, max(8, ((max_elems // (8 * d_lanes)) // 8) * 8))

    # Batch tile: as big as the budget allows, capped so the "parallel" axis has
    # >=2 (>=4 for bigger N) steps and both TensorCores get work on megacore parts.
    n_rows8 = ((n_rows + 7) // 8) * 8
    if tile_n is not None:
        tn = min(n_rows8, max(8, (tile_n // 8) * 8))
    else:
        tn = min(n_rows8, max(8, ((max_elems // (ts * d_lanes)) // 8) * 8))
        if n_rows >= 64:
            tn = min(tn, 8 * pl.cdiv(pl.cdiv(n_rows, 4), 8))
        elif n_rows >= 16:
            tn = min(tn, 8 * pl.cdiv(pl.cdiv(n_rows, 2), 8))
        tn = max(tn, 8)

    grid = (pl.cdiv(n_rows, tn), pl.cdiv(S, ts))

    per_sample = pl.pallas_call(
        _masked_cos_loss_kernel,
        out_shape=jax.ShapeDtypeStruct((n_rows, 1), jnp.float32),
        grid=grid,
        in_specs=[
            pl.BlockSpec((tn, 1), lambda i, j: (i, 0)),          # per-sample lengths
            pl.BlockSpec((tn, ts, D), lambda i, j: (i, j, 0)),   # src_embeds tile
            pl.BlockSpec((tn, ts, D), lambda i, j: (i, j, 0)),   # preds tile
        ],
        out_specs=pl.BlockSpec((tn, 1), lambda i, j: (i, 0)),    # resident across j (accumulator)
        compiler_params=pltpu.CompilerParams(
            dimension_semantics=("parallel", "arbitrary"),
            vmem_limit_bytes=vmem_limit,
        ),
    )(lens2, src_embeds, preds)

    # Tiny final reduction outside the kernel (filler rows, if any, sliced away).
    return jnp.sum(per_sample[:N, 0]) / N


def _reference_loss(src_embeds, preds, src, pad=PAD):
    se = np.asarray(src_embeds, dtype=np.float64)
    pr = np.asarray(preds, dtype=np.float64)
    s = np.asarray(src)
    total = 0.0
    for i in range(s.shape[0]):
        pad_pos = np.nonzero(s[i] == pad)[0]
        L = int(pad_pos[0]) if pad_pos.shape[0] else s.shape[1]
        e, p = se[i, :L], pr[i, :L]
        cos = (e * p).sum(-1) / (
            np.maximum(np.linalg.norm(e, axis=-1), EPS)
            * np.maximum(np.linalg.norm(p, axis=-1), EPS)
        )
        total += np.mean(1.0 - cos)
    return total / s.shape[0]


if __name__ == "__main__":
    key = jax.random.PRNGKey(0)

    # --- case 1: the module's implied small shapes: batch=2, seq=8, hidden=32 ---
    N, S, D = 2, 8, 32
    k1, k2, key = jax.random.split(key, 3)
    src_embeds = jax.random.normal(k1, (N, S, D), dtype=jnp.float32)
    preds = jax.random.normal(k2, (N, S, D), dtype=jnp.float32)
    src_np = np.full((N, S), 3, dtype=np.int32)
    src_np[0, 5:] = PAD                 # sample 0 padded from position 5, sample 1 no pad
    src = jnp.asarray(src_np)

    out = jax.block_until_ready(masked_cosine_embedding_loss(src_embeds, preds, src))
    ref = _reference_loss(src_embeds, preds, src)
    assert np.allclose(np.asarray(out), ref, rtol=1e-5, atol=1e-5), (out, ref)

    # --- case 2: multi-step grid on BOTH axes + partial edge blocks (N=11, S=12) ---
    N2, S2, D2 = 11, 12, 64
    k3, k4, key = jax.random.split(key, 3)
    src_embeds2 = jax.random.normal(k3, (N2, S2, D2), dtype=jnp.float32)
    preds2 = jax.random.normal(k4, (N2, S2, D2), dtype=jnp.float32)
    src2_np = np.full((N2, S2), 7, dtype=np.int32)
    for i in range(N2 - 1):             # varied pad positions; last sample has no pad
        src2_np[i, 3 + (i % (S2 - 4)):] = PAD
    src2 = jnp.asarray(src2_np)

    out2 = jax.block_until_ready(
        masked_cosine_embedding_loss(src_embeds2, preds2, src2, tile_n=8, tile_s=8))
    ref2 = _reference_loss(src_embeds2, preds2, src2)
    assert np.allclose(np.asarray(out2), ref2, rtol=1e-5, atol=1e-5), (out2, ref2)

    print("KERNEL_OK")
</pallas_src>

<mosaic_0001>
module attributes {stable_mosaic.version = 11 : i64} {
  func.func @_masked_cos_loss_kernel(%arg0: i32, %arg1: i32, %arg2: memref<8x1xi32, #tpu.memory_space<vmem>>, %arg3: memref<8x8x32xf32, #tpu.memory_space<vmem>>, %arg4: memref<8x8x32xf32, #tpu.memory_space<vmem>>, %arg5: memref<8x1xf32, #tpu.memory_space<vmem>>) attributes {dimension_semantics = [#tpu.dimension_semantics<parallel>, #tpu.dimension_semantics<arbitrary>], iteration_bounds = array<i64: 1, 1>, scalar_prefetch = 0 : i64, scratch_operands = 0 : i64, tpu.core_type = #tpu.core_type<tc>, window_params = [{transform_indices = @transform_0, window_bounds = array<i64: 8, 1>}, {transform_indices = @transform_1, window_bounds = array<i64: 8, 8, 32>}, {transform_indices = @transform_2, window_bounds = array<i64: 8, 8, 32>}, {transform_indices = @transform_3, window_bounds = array<i64: 8, 1>}]} {
    %c0_i32 = arith.constant 0 : i32
    %0 = arith.cmpi eq, %arg1, %c0_i32 : i32
    %1 = arith.extui %0 : i1 to i32
    %c0_i32_0 = arith.constant 0 : i32
    %2 = arith.cmpi ne, %1, %c0_i32_0 : i32
    scf.if %2 {
      %cst_21 = arith.constant 0.000000e+00 : f32
      %38 = vector.broadcast %cst_21 : f32 to vector<8x1xf32>
      %c0_22 = arith.constant 0 : index
      %c0_23 = arith.constant 0 : index
      %39 = vector.load %arg5[%c0_22, %c0_23] : memref<8x1xf32, #tpu.memory_space<vmem>>, vector<8x1xf32>
      tpu.vector_store %arg5[%c0_22, %c0_23], %38 {strides = array<i32>} : memref<8x1xf32, #tpu.memory_space<vmem>>, vector<8x1xf32>,
    } else {
    }
    %c0 = arith.constant 0 : index
    %c0_1 = arith.constant 0 : index
    %c0_2 = arith.constant 0 : index
    %3 = vector.load %arg3[%c0, %c0_1, %c0_2] : memref<8x8x32xf32, #tpu.memory_space<vmem>>, vector<8x8x32xf32>
    %c0_3 = arith.constant 0 : index
    %c0_4 = arith.constant 0 : index
    %c0_5 = arith.constant 0 : index
    %4 = vector.load %arg4[%c0_3, %c0_4, %c0_5] : memref<8x8x32xf32, #tpu.memory_space<vmem>>, vector<8x8x32xf32>
    %5 = arith.mulf %3, %4 : vector<8x8x32xf32>
    %cst = arith.constant dense<0.000000e+00> : vector<8x8xf32>
    %6 = vector.multi_reduction <add>, %5, %cst [2] : vector<8x8x32xf32> to vector<8x8xf32>
    %7 = arith.mulf %3, %3 : vector<8x8x32xf32>
    %cst_6 = arith.constant dense<0.000000e+00> : vector<8x8xf32>
    %8 = vector.multi_reduction <add>, %7, %cst_6 [2] : vector<8x8x32xf32> to vector<8x8xf32>
    %9 = arith.mulf %4, %4 : vector<8x8x32xf32>
    %cst_7 = arith.constant dense<0.000000e+00> : vector<8x8xf32>
    %10 = vector.multi_reduction <add>, %9, %cst_7 [2] : vector<8x8x32xf32> to vector<8x8xf32>
    %cst_8 = arith.constant 1.000000e-16 : f32
    %11 = vector.broadcast %cst_8 : f32 to vector<8x8xf32>
    %12 = arith.maximumf %8, %11 : vector<8x8xf32>
    %13 = math.rsqrt %12 : vector<8x8xf32>
    %cst_9 = arith.constant 1.000000e-16 : f32
    %14 = vector.broadcast %cst_9 : f32 to vector<8x8xf32>
    %15 = arith.maximumf %10, %14 : vector<8x8xf32>
    %16 = math.rsqrt %15 : vector<8x8xf32>
    %17 = arith.mulf %6, %13 : vector<8x8xf32>
    %18 = arith.mulf %17, %16 : vector<8x8xf32>
    %cst_10 = arith.constant 1.000000e+00 : f32
    %19 = vector.broadcast %cst_10 : f32 to vector<8x8xf32>
    %20 = arith.subf %19, %18 : vector<8x8xf32>
    %c0_11 = arith.constant 0 : index
    %c0_12 = arith.constant 0 : index
    %21 = vector.load %arg2[%c0_11, %c0_12] : memref<8x1xi32, #tpu.memory_space<vmem>>, vector<8x1xi32>
    %c8_i32 = arith.constant 8 : i32
    %22 = arith.muli %arg1, %c8_i32 : i32
    %23 = tpu.iota {dimensions = array<i32: 1>} : vector<8x8xi32>
    %24 = vector.broadcast %22 : i32 to vector<8x8xi32>
    %25 = arith.addi %24, %23 : vector<8x8xi32>
    %26 = vector.broadcast %21 : vector<8x1xi32> to vector<8x8xi32>
    %27 = arith.cmpi slt, %25, %26 : vector<8x8xi32>
    %cst_13 = arith.constant 0.000000e+00 : f32
    %28 = vector.broadcast %cst_13 : f32 to vector<8x8xf32>
    %29 = arith.select %27, %20, %28 : vector<8x8xi1>, vector<8x8xf32>
    %c0_14 = arith.constant 0 : index
    %c0_15 = arith.constant 0 : index
    %30 = vector.load %arg5[%c0_14, %c0_15] : memref<8x1xf32, #tpu.memory_space<vmem>>, vector<8x1xf32>
    %cst_16 = arith.constant dense<0.000000e+00> : vector<8xf32>
    %31 = vector.multi_reduction <add>, %29, %cst_16 [1] : vector<8x8xf32> to vector<8xf32>
    %32 = vector.shape_cast %31 : vector<8xf32> to vector<8x1xf32>
    %33 = arith.addf %30, %32 : vector<8x1xf32>
    %c0_17 = arith.constant 0 : index
    %c0_18 = arith.constant 0 : index
    %34 = vector.load %arg5[%c0_17, %c0_18] : memref<8x1xf32, #tpu.memory_space<vmem>>, vector<8x1xf32>
    tpu.vector_store %arg5[%c0_17, %c0_18], %33 {strides = array<i32>} : memref<8x1xf32, #tpu.memory_space<vmem>>, vector<8x1xf32>,
    %c0_i32_19 = arith.constant 0 : i32
    %35 = arith.cmpi eq, %arg1, %c0_i32_19 : i32
    %36 = arith.extui %35 : i1 to i32
    %c0_i32_20 = arith.constant 0 : i32
    %37 = arith.cmpi ne, %36, %c0_i32_20 : i32
    scf.if %37 {
      %c0_21 = arith.constant 0 : index
      %c0_22 = arith.constant 0 : index
      %38 = vector.load %arg5[%c0_21, %c0_22] : memref<8x1xf32, #tpu.memory_space<vmem>>, vector<8x1xf32>
      %39 = arith.sitofp %21 : vector<8x1xi32> to vector<8x1xf32>
      %40 = arith.divf %38, %39 : vector<8x1xf32>
      %c0_23 = arith.constant 0 : index
      %c0_24 = arith.constant 0 : index
      %41 = vector.load %arg5[%c0_23, %c0_24] : memref<8x1xf32, #tpu.memory_space<vmem>>, vector<8x1xf32>
      tpu.vector_store %arg5[%c0_23, %c0_24], %40 {strides = array<i32>} : memref<8x1xf32, #tpu.memory_space<vmem>>, vector<8x1xf32>,
    } else {
    }
    return
  }
  func.func @transform_0(%arg0: i32, %arg1: i32) -> (i32, i32) {
    %c0_i32 = arith.constant 0 : i32
    %c0_i32_0 = arith.constant 0 : i32
    return %arg0, %c0_i32 : i32, i32
  }
  func.func @transform_1(%arg0: i32, %arg1: i32) -> (i32, i32, i32) {
    %c0_i32 = arith.constant 0 : i32
    %c0_i32_0 = arith.constant 0 : i32
    return %arg0, %arg1, %c0_i32 : i32, i32, i32
  }
  func.func @transform_2(%arg0: i32, %arg1: i32) -> (i32, i32, i32) {
    %c0_i32 = arith.constant 0 : i32
    %c0_i32_0 = arith.constant 0 : i32
    return %arg0, %arg1, %c0_i32 : i32, i32, i32
  }
  func.func @transform_3(%arg0: i32, %arg1: i32) -> (i32, i32) {
    %c0_i32 = arith.constant 0 : i32
    %c0_i32_0 = arith.constant 0 : i32
    return %arg0, %c0_i32 : i32, i32
  }
}

</mosaic_0001>

<llo_original>
// kernel: tpu_custom_call.1
$region0: #{tpu_custom_call.1}
  #allocation0 [shape = 'u32[]', space=smem, size = 0x4, offset = 0x4, fixed_abs, tag = 'smem constant byte address 0x4 - core index']
  #allocation1 [shape = 'u32[144,128]{1,0:T(1,128)}', space=vmem, size = 0x12000, scoped, tag = 'internal scratch']
  %s0 = inlined_call_operand.vmem [shape: s32[8,1], index: 0, kind: input, shape index: {}]
  %s1 = inlined_call_operand.hbm [shape: f32[8,8,32], index: 1, kind: input, shape index: {}]
  %s2 = inlined_call_operand.hbm [shape: f32[8,8,32], index: 2, kind: input, shape index: {}]
  %s3 = inlined_call_operand.vmem [shape: f32[8,1], index: 3, kind: output, shape index: {}]
  %s4 = sld [smem:[#allocation0]]
  $region38: #{tpu_custom_call.1} parent=0
    _
  %s6 = ssub.s32 1, %s4
  %s7 = scalar_select 0, %s6, %s4
  $region1: #{tpu_custom_call.1} parent=0
    #allocation2 [shape = 'u8[32768]{0}', space=vmem, size = 0x8000, scoped, tag = 'input window, operand 1, single buffered']
    #allocation3 [shape = 's32[1]{0}', space=sflag, size = 0x4, scoped, tag = 'scoped memory for tpu_custom_call.1']
    #allocation4 [shape = 'u8[32768]{0}', space=vmem, size = 0x8000, scoped, tag = 'input window, operand 2, single buffered']
    #allocation5 [shape = 's32[1]{0}', space=sflag, size = 0x4, scoped, tag = 'scoped memory for tpu_custom_call.1']
    %8 = vsyncpa [#allocation3], 0
    %9 = vsyncpa [#allocation5], 0
    // Predicated region
    $region2: #{tpu_custom_call.1} parent=1 // pred_check
      _
    $region3: #{tpu_custom_call.1} parent=1 // pred_check_branch
      %11 = sbr.rel (0) target = $region5
    $region4: #{tpu_custom_call.1} parent=1 // pred_region
      _
    $region5: #{tpu_custom_call.1} parent=1 // pred_fallthru
      _
    // Predicated region
    $region6: #{tpu_custom_call.1} parent=1 // pred_check
      _
    $region7: #{tpu_custom_call.1} parent=1 // pred_check_branch
      %13 = sbr.rel (0) target = $region9
    $region8: #{tpu_custom_call.1} parent=1 // pred_region
      %s15 = ssub.s32 1024, 1024
      %16 = vsyncadd [#allocation3], %s15
      %s17 = sshll.u32 [#allocation2], 4
      %s18 = int_to_ptr.vmem [resolvable:$true] %s17
      %23 = dma.hbm_to_vmem [thread:$0]  %s1, 1024, %s18, [#allocation3], 128, 128, 8
    $region9: #{tpu_custom_call.1} parent=1 // pred_fallthru
      _
    // Predicated region
    $region10: #{tpu_custom_call.1} parent=1 // pred_check
      _
    $region11: #{tpu_custom_call.1} parent=1 // pred_check_branch
      %25 = sbr.rel (0) target = $region13
    $region12: #{tpu_custom_call.1} parent=1 // pred_region
      %s27 = ssub.s32 1024, 1024
      %28 = vsyncadd [#allocation5], %s27
      %s29 = sshll.u32 [#allocation4], 4
      %s30 = int_to_ptr.vmem [resolvable:$true] %s29
      %35 = dma.hbm_to_vmem [thread:$0]  %s2, 1024, %s30, [#allocation5], 128, 128, 8
    $region13: #{tpu_custom_call.1} parent=1 // pred_fallthru
      _
    // Predicated region
    $region14: #{tpu_custom_call.1} parent=1 // pred_check
      _
    $region15: #{tpu_custom_call.1} parent=1 // pred_check_branch
      %37 = sbr.rel (0) target = $region17
    $region16: #{tpu_custom_call.1} parent=1 // pred_region
      %38 = dma.done [#allocation3], 1024
    $region17: #{tpu_custom_call.1} parent=1 // pred_fallthru
      _
    // Predicated region
    $region18: #{tpu_custom_call.1} parent=1 // pred_check
      _
    $region19: #{tpu_custom_call.1} parent=1 // pred_check_branch
      %40 = sbr.rel (0) target = $region21
    $region20: #{tpu_custom_call.1} parent=1 // pred_region
      %41 = dma.done [#allocation5], 1024
    $region21: #{tpu_custom_call.1} parent=1 // pred_fallthru
      _
    %p42 = scmp.eq.s32.totalorder 0, 0
    // Predicated region
    $region22: #{tpu_custom_call.1} parent=1 // pred_check
      %p43 = pneg %p42
    $region23: #{tpu_custom_call.1} parent=1 // pred_check_branch
      %45 = sbr.rel (%p43) target = $region25
    $region24: #{tpu_custom_call.1} parent=1 // pred_region
      %vm46 = vcmask 7168
      %47 = vst.msk [vmem:[%s3] sm:$0xff] %vm46, 0.0
    $region25: #{tpu_custom_call.1} parent=1 // pred_fallthru
      _
    %v48 = vld [vmem:[#allocation2] sm:$0xff]
    %v49 = vld [vmem:[#allocation2 + $0x8] sm:$0xff]
    %v50 = vld [vmem:[#allocation2 + $0x10] sm:$0xff]
    %v51 = vld [vmem:[#allocation2 + $0x18] sm:$0xff]
    %v52 = vld [vmem:[#allocation2 + $0x20] sm:$0xff]
    %v53 = vld [vmem:[#allocation2 + $0x28] sm:$0xff]
    %v54 = vld [vmem:[#allocation2 + $0x30] sm:$0xff]
    %v55 = vld [vmem:[#allocation2 + $0x38] sm:$0xff]
    %v56 = vld [vmem:[#allocation4] sm:$0xff]
    %v57 = vld [vmem:[#allocation4 + $0x8] sm:$0xff]
    %v58 = vld [vmem:[#allocation4 + $0x10] sm:$0xff]
    %v59 = vld [vmem:[#allocation4 + $0x18] sm:$0xff]
    %v60 = vld [vmem:[#allocation4 + $0x20] sm:$0xff]
    %v61 = vld [vmem:[#allocation4 + $0x28] sm:$0xff]
    %v62 = vld [vmem:[#allocation4 + $0x30] sm:$0xff]
    %v63 = vld [vmem:[#allocation4 + $0x38] sm:$0xff]
    %v64 = vmul.f32 %v48, %v56
    %v65 = vmul.f32 %v49, %v57
    %v66 = vmul.f32 %v50, %v58
    %v67 = vmul.f32 %v51, %v59
    %v68 = vmul.f32 %v52, %v60
    %v69 = vmul.f32 %v53, %v61
    %v70 = vmul.f32 %v54, %v62
    %v71 = vmul.f32 %v55, %v63
    %vm72 = vcmask 261120
    %v73 = vsel %vm72, %v64, 0.0
    %74 = vadd.xlane.f32.xlu0 %v73
    %v75 = vpop.xlane.xlu0 %74
    %v76 = vsel %vm72, %v65, 0.0
    %77 = vadd.xlane.f32.xlu0 %v76
    %v78 = vpop.xlane.xlu0 %77
    %v79 = vsel %vm72, %v66, 0.0
    %80 = vadd.xlane.f32.xlu0 %v79
    %v81 = vpop.xlane.xlu0 %80
    %v82 = vsel %vm72, %v67, 0.0
    %83 = vadd.xlane.f32.xlu0 %v82
    %v84 = vpop.xlane.xlu0 %83
    %v85 = vsel %vm72, %v68, 0.0
    %86 = vadd.xlane.f32.xlu0 %v85
    %v87 = vpop.xlane.xlu0 %86
    %v88 = vsel %vm72, %v69, 0.0
    %89 = vadd.xlane.f32.xlu0 %v88
    %v90 = vpop.xlane.xlu0 %89
    %v91 = vsel %vm72, %v70, 0.0
    %92 = vadd.xlane.f32.xlu0 %v91
    %v93 = vpop.xlane.xlu0 %92
    %v94 = vsel %vm72, %v71, 0.0
    %95 = vadd.xlane.f32.xlu0 %v94
    %v96 = vpop.xlane.xlu0 %95
    %v97 = vmul.f32 %v48, %v48
    %v98 = vmul.f32 %v49, %v49
    %v99 = vmul.f32 %v50, %v50
    %v100 = vmul.f32 %v51, %v51
    %v101 = vmul.f32 %v52, %v52
    %v102 = vmul.f32 %v53, %v53
    %v103 = vmul.f32 %v54, %v54
    %v104 = vmul.f32 %v55, %v55
    %v105 = vsel %vm72, %v97, 0.0
    %106 = vadd.xlane.f32.xlu0 %v105
    %v107 = vpop.xlane.xlu0 %106
    %v108 = vsel %vm72, %v98, 0.0
    %109 = vadd.xlane.f32.xlu0 %v108
    %v110 = vpop.xlane.xlu0 %109
    %v111 = vsel %vm72, %v99, 0.0
    %112 = vadd.xlane.f32.xlu0 %v111
    %v113 = vpop.xlane.xlu0 %112
    %v114 = vsel %vm72, %v100, 0.0
    %115 = vadd.xlane.f32.xlu0 %v114
    %v116 = vpop.xlane.xlu0 %115
    %v117 = vsel %vm72, %v101, 0.0
    %118 = vadd.xlane.f32.xlu0 %v117
    %v119 = vpop.xlane.xlu0 %118
    %v120 = vsel %vm72, %v102, 0.0
    %121 = vadd.xlane.f32.xlu0 %v120
    %v122 = vpop.xlane.xlu0 %121
    %v123 = vsel %vm72, %v103, 0.0
    %124 = vadd.xlane.f32.xlu0 %v123
    %v125 = vpop.xlane.xlu0 %124
    %v126 = vsel %vm72, %v104, 0.0
    %127 = vadd.xlane.f32.xlu0 %v126
    %v128 = vpop.xlane.xlu0 %127
    %v129 = vmul.f32 %v56, %v56
    %v130 = vmul.f32 %v57, %v57
    %v131 = vmul.f32 %v58, %v58
    %v132 = vmul.f32 %v59, %v59
    %v133 = vmul.f32 %v60, %v60
    %v134 = vmul.f32 %v61, %v61
    %v135 = vmul.f32 %v62, %v62
    %v136 = vmul.f32 %v63, %v63
    %v137 = vsel %vm72, %v129, 0.0
    %138 = vadd.xlane.f32.xlu0 %v137
    %v139 = vpop.xlane.xlu0 %138
    %v140 = vsel %vm72, %v130, 0.0
    %141 = vadd.xlane.f32.xlu0 %v140
    %v142 = vpop.xlane.xlu0 %141
    %v143 = vsel %vm72, %v131, 0.0
    %144 = vadd.xlane.f32.xlu0 %v143
    %v145 = vpop.xlane.xlu0 %144
    %v146 = vsel %vm72, %v132, 0.0
    %147 = vadd.xlane.f32.xlu0 %v146
    %v148 = vpop.xlane.xlu0 %147
    %v149 = vsel %vm72, %v133, 0.0
    %150 = vadd.xlane.f32.xlu0 %v149
    %v151 = vpop.xlane.xlu0 %150
    %v152 = vsel %vm72, %v134, 0.0
    %153 = vadd.xlane.f32.xlu0 %v152
    %v154 = vpop.xlane.xlu0 %153
    %v155 = vsel %vm72, %v135, 0.0
    %156 = vadd.xlane.f32.xlu0 %v155
    %v157 = vpop.xlane.xlu0 %156
    %v158 = vsel %vm72, %v136, 0.0
    %159 = vadd.xlane.f32.xlu0 %v158
    %v160 = vpop.xlane.xlu0 %159
    %v161 = vmax.f32 %v107, 1e-16
    %v162 = vmax.f32 %v110, 1e-16
    %v163 = vmax.f32 %v113, 1e-16
    %v164 = vmax.f32 %v116, 1e-16
    %v165 = vmax.f32 %v119, 1e-16
    %v166 = vmax.f32 %v122, 1e-16
    %v167 = vmax.f32 %v125, 1e-16
    %v168 = vmax.f32 %v128, 1e-16
    %v169 = vrsqrt.pop %v161
    %v170 = vrsqrt.pop %v162
    %v171 = vrsqrt.pop %v163
    %v172 = vrsqrt.pop %v164
    %v173 = vrsqrt.pop %v165
    %v174 = vrsqrt.pop %v166
    %v175 = vrsqrt.pop %v167
    %v176 = vrsqrt.pop %v168
    %v177 = vmax.f32 %v139, 1e-16
    %v178 = vmax.f32 %v142, 1e-16
    %v179 = vmax.f32 %v145, 1e-16
    %v180 = vmax.f32 %v148, 1e-16
    %v181 = vmax.f32 %v151, 1e-16
    %v182 = vmax.f32 %v154, 1e-16
    %v183 = vmax.f32 %v157, 1e-16
    %v184 = vmax.f32 %v160, 1e-16
    %v185 = vrsqrt.pop %v177
    %v186 = vrsqrt.pop %v178
    %v187 = vrsqrt.pop %v179
    %v188 = vrsqrt.pop %v180
    %v189 = vrsqrt.pop %v181
    %v190 = vrsqrt.pop %v182
    %v191 = vrsqrt.pop %v183
    %v192 = vrsqrt.pop %v184
    %v193 = vmul.f32 %v75, %v169
    %v194 = vmul.f32 %v78, %v170
    %v195 = vmul.f32 %v81, %v171
    %v196 = vmul.f32 %v84, %v172
    %v197 = vmul.f32 %v87, %v173
    %v198 = vmul.f32 %v90, %v174
    %v199 = vmul.f32 %v93, %v175
    %v200 = vmul.f32 %v96, %v176
    %v201 = vmul.f32 %v193, %v185
    %v202 = vmul.f32 %v194, %v186
    %v203 = vmul.f32 %v195, %v187
    %v204 = vmul.f32 %v196, %v188
    %v205 = vmul.f32 %v197, %v189
    %v206 = vmul.f32 %v198, %v190
    %v207 = vmul.f32 %v199, %v191
    %v208 = vmul.f32 %v200, %v192
    %v209 = vsub.f32 1.0, %v201
    %v210 = vsub.f32 1.0, %v202
    %v211 = vsub.f32 1.0, %v203
    %v212 = vsub.f32 1.0, %v204
    %v213 = vsub.f32 1.0, %v205
    %v214 = vsub.f32 1.0, %v206
    %v215 = vsub.f32 1.0, %v207
    %v216 = vsub.f32 1.0, %v208
    %v217 = vld [vmem:[%s0] sm:$0xff]
    %s218 = smul.u32 0, 8
    %v219 = vlaneseq
    %v220 = vand.u32 %v219, 127
    %v221 = vstv %s218
    %v222 = vadd.s32 %v221, %v220
    %223 = vset.pattern.permute.xlu0 0
    %224 = vperm.xlu0 %223, %v217
    %v225 = vpop.permute.xlu0 %224
    %vm226 = vcmp.lt.s32.totalorder %v222, %v225
    %v235 = vlaneseq
    %v236 = vshrl.u32 %v235, 7
    %v237 = vsub.s32 %v220, %v236
    %v238 = vrot.slane %v209, %v237
    %v239 = vlaneseq
    %v240 = vshrl.u32 %v239, 7
    %v241 = vsub.s32 %v220, %v240
    %v242 = vrot.slane %v210, %v241
    %v243 = vlaneseq
    %v244 = vshrl.u32 %v243, 7
    %v245 = vsub.s32 %v220, %v244
    %v246 = vrot.slane %v211, %v245
    %v247 = vlaneseq
    %v248 = vshrl.u32 %v247, 7
    %v249 = vsub.s32 %v220, %v248
    %v250 = vrot.slane %v212, %v249
    %v251 = vlaneseq
    %v252 = vshrl.u32 %v251, 7
    %v253 = vsub.s32 %v220, %v252
    %v254 = vrot.slane %v213, %v253
    %v255 = vlaneseq
    %v256 = vshrl.u32 %v255, 7
    %v257 = vsub.s32 %v220, %v256
    %v258 = vrot.slane %v214, %v257
    %v259 = vlaneseq
    %v260 = vshrl.u32 %v259, 7
    %v261 = vsub.s32 %v220, %v260
    %v262 = vrot.slane %v215, %v261
    %v263 = vlaneseq
    %v264 = vshrl.u32 %v263, 7
    %v265 = vsub.s32 %v220, %v264
    %v266 = vrot.slane %v216, %v265
    %vm267 = vcmask 1041409
    %v268 = vsel %vm267, %v242, %v238
    %vm269 = vcmask 1042434
    %v270 = vsel %vm269, %v246, %v268
    %vm271 = vcmask 1043459
    %v272 = vsel %vm271, %v250, %v270
    %vm273 = vcmask 1044484
    %v274 = vsel %vm273, %v254, %v272
    %vm275 = vcmask 1045509
    %v276 = vsel %vm275, %v258, %v274
    %vm277 = vcmask 1046534
    %v278 = vsel %vm277, %v262, %v276
    %vm279 = vcmask 1047559
    %v280 = vsel %vm279, %v266, %v278
    %v282 = vsel %vm226, %v280, 0.0
    %v283 = vld [vmem:[%s3] sm:$0xff]
    %vm284 = vcmask 64512
    %v285 = vsel %vm284, %v282, 0.0
    %286 = vadd.xlane.f32.xlu0 %v285
    %v287 = vpop.xlane.xlu0 %286
    %v288 = vadd.f32 %v283, %v287
    %vm289 = vcmask 7168
    %290 = vst.msk [vmem:[%s3] sm:$0xff] %vm289, %v288
    // Predicated region
    $region26: #{tpu_custom_call.1} parent=1 // pred_check
      %p291 = pneg %p42
    $region27: #{tpu_custom_call.1} parent=1 // pred_check_branch
      %293 = sbr.rel (%p291) target = $region29
    $region28: #{tpu_custom_call.1} parent=1 // pred_region
      %v294 = vld [vmem:[%s3] sm:$0xff]
      %v295 = vcvt.s32.f32 %v217
      %v296 = vrcp.pop %v295
      %v297 = vmul.f32 %v294, %v296
      %298 = vst.msk [vmem:[%s3] sm:$0xff] %vm289, %v297
    $region29: #{tpu_custom_call.1} parent=1 // pred_fallthru
      _
    // Predicated region
    $region30: #{tpu_custom_call.1} parent=1 // pred_check
      _
    $region31: #{tpu_custom_call.1} parent=1 // pred_check_branch
      %300 = sbr.rel (0) target = $region33
    $region32: #{tpu_custom_call.1} parent=1 // pred_region
      _
    $region33: #{tpu_custom_call.1} parent=1 // pred_fallthru
      _
    // Predicated region
    $region34: #{tpu_custom_call.1} parent=1 // pred_check
      _
    $region35: #{tpu_custom_call.1} parent=1 // pred_check_branch
      %302 = sbr.rel (0) target = $region37
    $region36: #{tpu_custom_call.1} parent=1 // pred_region
      _
    $region37: #{tpu_custom_call.1} parent=1 // pred_fallthru
      _
    %303 = vsyncpa [#allocation3], 1
    %304 = vsyncpa [#allocation5], 1

</llo_original>
